<compile_context>
chip_gen: v6e
topology: v6e:2x2x1
jax: 0.10.0
libtpu: 0.0.40
codegen_flags: <defaults>
</compile_context>

<pallas_src>
import functools

import numpy as np
import jax
import jax.numpy as jnp
from jax.experimental import pallas as pl
from jax.experimental.pallas import tpu as pltpu


# --------------------------------------------------------------------------
# Parameter construction (mirrors init_kernels(..., invers=True) from Tree.py)
# --------------------------------------------------------------------------
def init_kernels_np(win_len, fft_len, win_type="hamming"):
    if win_type is None or win_type == "None":
        window = np.ones(win_len, dtype=np.float64)
    elif win_type == "hamming":
        # periodic hamming == scipy.signal.get_window('hamming', N, fftbins=True)
        window = 0.54 - 0.46 * np.cos(2.0 * np.pi * np.arange(win_len) / win_len)
    else:
        raise ValueError(f"unsupported win_type {win_type}")
    N = fft_len
    fourier_basis = np.fft.rfft(np.eye(N))[:win_len]          # (win_len, N//2+1)
    real_kernel = np.real(fourier_basis)
    imag_kernel = np.imag(fourier_basis)
    kernel = np.concatenate([real_kernel, imag_kernel], 1).T  # (N+2, win_len)
    kernel = np.linalg.pinv(kernel).T                         # inverse basis
    kernel = kernel * window                                  # apply window
    return kernel.astype(np.float32), window.astype(np.float32)


# --------------------------------------------------------------------------
# Pallas kernel: inverse-STFT synthesis (MXU matmul + lane-shifted OLA)
# --------------------------------------------------------------------------
def _conv_istft_kernel(x_ref, w_ref, inv_ref, o_ref, *, tile_t, m, stride, n_chunks):
    # x_ref:   (1, Cp, tile_t)   one batch element's chunk of frames (native layout)
    # w_ref:   (Kp, Cp)          transposed inverse-DFT basis, Kp = m*stride (shared)
    # inv_ref: (stride, R)       1/(window-overlap + 1e-8), R = T_pad + m - 1 (shared)
    # o_ref:   (1, stride, R)    lane-dense OLA accumulator / output
    chunk_out = tile_t + m - 1

    # frames^T[k, t] = sum_c W^T[k, c] * x[c, t]  -> (Kp, tile_t) on the MXU,
    # f32 accumulation; time (frames) lands on the lane axis.
    frames_t = jnp.dot(w_ref[...], x_ref[0], preferred_element_type=jnp.float32)

    # Local overlap-add: contrib[s, r] = sum_j frames^T[j*stride + s, r - j]
    # -> m sublane-aligned (stride, tile_t) slabs, each lane-shifted by j and
    #    summed into a (stride, tile_t + m - 1) slab.  (A pltpu.roll of a
    #    zero-extended slab is an equivalent XLU-side alternative.)
    acc = None
    for j in range(m):
        slab = frames_t[j * stride:(j + 1) * stride, :]        # (stride, tile_t)
        if m > 1:
            parts = []
            if j > 0:
                parts.append(jnp.zeros((stride, j), jnp.float32))
            parts.append(slab)
            if m - 1 - j > 0:
                parts.append(jnp.zeros((stride, m - 1 - j), jnp.float32))
            slab = jnp.concatenate(parts, axis=1)              # (stride, chunk_out)
        acc = slab if acc is None else acc + slab

    if n_chunks == 1:
        # Single chunk covers the whole signal: normalize and store once.
        o_ref[0] = acc * inv_ref[...]
    else:
        c = pl.program_id(1)

        @pl.when(c == 0)
        def _init():
            o_ref[...] = jnp.zeros_like(o_ref)

        # Accumulate this chunk at lane offset c*tile_t (adjacent chunks
        # overlap by m-1 lanes) into the resident output block.
        off = c * tile_t
        if tile_t % 128 == 0:
            off = pl.multiple_of(off, 128)
        o_ref[0, :, pl.ds(off, chunk_out)] = (
            o_ref[0, :, pl.ds(off, chunk_out)] + acc)

        @pl.when(c == pl.num_programs(1) - 1)
        def _finalize():
            o_ref[0] = o_ref[0] * inv_ref[...]


def conv_istft(x, weight, window, *, stride, win_len, phase=None,
               tile_t=512, compute_dtype=jnp.float32, c_multiple=1):
    """x: (B, C, T) float32 (real||imag spectrum or mags); weight: (C, win_len);
    window: (win_len,). Optional phase: (B, C, T) as in the torch module.
    compute_dtype=jnp.bfloat16 enables the fast MXU path (looser accuracy);
    c_multiple pads the contraction dim for MXU tile alignment."""
    if phase is not None:
        x = jnp.concatenate([x * jnp.cos(phase), x * jnp.sin(phase)], axis=1)

    B, C, T = x.shape
    m = -(-win_len // stride)                   # frames overlapping each hop
    Kp = m * stride                             # stride-padded frame length
    out_len = (T - 1) * stride + win_len
    cut = win_len - stride

    # ---- frame-chunking over T (restores intra-batch pipelining) ----
    if T <= tile_t:
        tile_t = T                              # single chunk (block == full dim)
        t_pad = T
    else:
        tile_t = max(128, (tile_t // 128) * 128)  # lane tiling: chunk must be 128-aligned
        t_pad = -(-T // tile_t) * tile_t
    n_chunks = t_pad // tile_t
    pad_rows = t_pad + m - 1                    # padded output rows (x stride samples each)

    # ---- batch/x-invariant prep, hoisted out of the kernel ----
    # transposed synthesis basis (Kp, C); zero-pad frame axis if stride doesn't divide win_len
    w_t = jnp.swapaxes(weight.astype(jnp.float32), 0, 1)       # (win_len, C)
    if Kp != win_len:
        w_t = jnp.pad(w_t, ((0, Kp - win_len), (0, 0)))

    # 1 / (window-overlap + 1e-8), built directly in the transposed (stride, rows) layout
    wsq = jnp.zeros((Kp,), jnp.float32).at[:win_len].set(
        window.astype(jnp.float32) ** 2).reshape(m, stride)
    coff_t = jnp.zeros((stride, pad_rows), jnp.float32)
    for j in range(m):
        coff_t = coff_t.at[:, j:j + T].add(wsq[j][:, None])    # true-T frames only
    inv_coff_t = 1.0 / (coff_t + 1e-8)

    # optional contraction-dim padding for MXU tile alignment (zeros contribute nothing)
    c_pad = -(-C // c_multiple) * c_multiple if c_multiple > 1 else C
    x_in = x
    if c_pad != C:
        x_in = jnp.pad(x_in, ((0, 0), (0, c_pad - C), (0, 0)))
        w_t = jnp.pad(w_t, ((0, 0), (0, c_pad - C)))
    if t_pad != T:                              # zero frames add zero contributions
        x_in = jnp.pad(x_in, ((0, 0), (0, 0), (0, t_pad - T)))
    x_in = x_in.astype(compute_dtype)
    w_t = w_t.astype(compute_dtype)

    kern = functools.partial(_conv_istft_kernel, tile_t=tile_t, m=m,
                             stride=stride, n_chunks=n_chunks)

    out2d_t = pl.pallas_call(
        kern,
        out_shape=jax.ShapeDtypeStruct((B, stride, pad_rows), jnp.float32),
        grid_spec=pltpu.PrefetchScalarGridSpec(
            num_scalar_prefetch=0,
            grid=(B, n_chunks),                 # chunk axis last (output revisited along it)
            in_specs=[
                pl.BlockSpec((1, c_pad, tile_t), lambda b, c: (b, 0, c)),   # x (pipelined chunks)
                pl.BlockSpec((Kp, c_pad), lambda b, c: (0, 0)),             # W^T (shared, fetched once)
                pl.BlockSpec((stride, pad_rows), lambda b, c: (0, 0)),      # 1/coff (shared, fetched once)
            ],
            out_specs=pl.BlockSpec((1, stride, pad_rows), lambda b, c: (b, 0, 0)),
        ),
        compiler_params=pltpu.CompilerParams(
            dimension_semantics=("parallel", "arbitrary"),
            vmem_limit_bytes=32 * 1024 * 1024,
        ),
    )(x_in, w_t, inv_coff_t)

    # lane-dense (B, stride, rows) -> (B, 1, out_len): wrapper-side layout plumbing
    full = jnp.transpose(out2d_t, (0, 2, 1)).reshape(B, 1, pad_rows * stride)
    return full[..., cut:out_len - cut]


# --------------------------------------------------------------------------
# Pure numpy reference (mirrors the torch forward with conv_transpose1d)
# --------------------------------------------------------------------------
def ref_conv_istft(x, weight, window, stride, win_len):
    B, C, T = x.shape
    out_len = (T - 1) * stride + win_len
    out = np.zeros((B, 1, out_len), dtype=np.float64)
    coff = np.zeros(out_len, dtype=np.float64)
    wsq = window.astype(np.float64) ** 2
    for t in range(T):
        coff[t * stride:t * stride + win_len] += wsq
    for b in range(B):
        frames = weight.T.astype(np.float64) @ x[b].astype(np.float64)  # (K, T)
        for t in range(T):
            out[b, 0, t * stride:t * stride + win_len] += frames[:, t]
    out = out / (coff + 1e-8)
    cut = win_len - stride
    return out[..., cut:out_len - cut]


if __name__ == "__main__":
    # small synthetic config: win_len=16, win_inc=8, fft_len=16 -> C = 18
    win_len, win_inc, fft_len = 16, 8, 16
    B, T = 2, 8
    C = fft_len + 2

    weight_np, window_np = init_kernels_np(win_len, fft_len, "hamming")

    key = jax.random.PRNGKey(0)
    x = jax.random.normal(key, (B, C, T), dtype=jnp.float32)

    weight = jnp.asarray(weight_np)
    window = jnp.asarray(window_np)

    ref = ref_conv_istft(np.asarray(x), weight_np, window_np, win_inc, win_len)

    # default f32 path: reference accuracy
    out = conv_istft(x, weight, window, stride=win_inc, win_len=win_len)
    out = jax.block_until_ready(out)
    assert out.shape == ref.shape, (out.shape, ref.shape)
    assert np.allclose(np.asarray(out), ref, atol=1e-4, rtol=1e-4)

    # bf16 MXU path with contraction-dim padding (per perf review); looser tolerance
    out_bf16 = conv_istft(x, weight, window, stride=win_inc, win_len=win_len,
                          compute_dtype=jnp.bfloat16, c_multiple=32)
    out_bf16 = jax.block_until_ready(out_bf16)
    assert out_bf16.shape == ref.shape
    assert np.allclose(np.asarray(out_bf16), ref, atol=5e-2, rtol=5e-2)

    print("KERNEL_OK")
</pallas_src>

<mosaic_0001>
module attributes {stable_mosaic.version = 11 : i64} {
  func.func @_conv_istft_kernel(%arg0: i32, %arg1: i32, %arg2: memref<1x18x8xf32, #tpu.memory_space<vmem>>, %arg3: memref<16x18xf32, #tpu.memory_space<vmem>>, %arg4: memref<8x9xf32, #tpu.memory_space<vmem>>, %arg5: memref<1x8x9xf32, #tpu.memory_space<vmem>>) attributes {dimension_semantics = [#tpu.dimension_semantics<parallel>, #tpu.dimension_semantics<arbitrary>], iteration_bounds = array<i64: 2, 1>, scalar_prefetch = 0 : i64, scratch_operands = 0 : i64, tpu.core_type = #tpu.core_type<tc>, window_params = [{transform_indices = @transform_0, window_bounds = array<i64: 1, 18, 8>}, {pipeline_mode = #tpu.pipeline_mode<synchronous>, transform_indices = @transform_1, window_bounds = array<i64: 16, 18>}, {pipeline_mode = #tpu.pipeline_mode<synchronous>, transform_indices = @transform_2, window_bounds = array<i64: 8, 9>}, {transform_indices = @transform_3, window_bounds = array<i64: 1, 8, 9>}]} {
    %c0 = arith.constant 0 : index
    %c0_0 = arith.constant 0 : index
    %0 = vector.load %arg3[%c0, %c0_0] : memref<16x18xf32, #tpu.memory_space<vmem>>, vector<16x18xf32>
    %c0_1 = arith.constant 0 : index
    %c0_2 = arith.constant 0 : index
    %c0_3 = arith.constant 0 : index
    %1 = vector.load %arg2[%c0_1, %c0_2, %c0_3] : memref<1x18x8xf32, #tpu.memory_space<vmem>>, vector<1x18x8xf32>
    %2 = vector.shape_cast %1 : vector<1x18x8xf32> to vector<18x8xf32>
    %cst = arith.constant dense<0.000000e+00> : vector<16x8xf32>
    %3 = tpu.matmul %0, %2, %cst {dimension_numbers = #tpu.dot_dimension_numbers<[1], [0], [0], [1], [0, 0, 1, 1], [], []>} : vector<16x18xf32>, vector<18x8xf32>, vector<16x8xf32> -> vector<16x8xf32>
    %4 = vector.extract_strided_slice %3 {offsets = [0, 0], sizes = [8, 8], strides = [1, 1]} : vector<16x8xf32> to vector<8x8xf32>
    %cst_4 = arith.constant 0.000000e+00 : f32
    %5 = vector.broadcast %cst_4 : f32 to vector<8x1xf32>
    %6 = tpu.concatenate %4, %5 in 1 : vector<8x8xf32>, vector<8x1xf32> -> vector<8x9xf32>
    %7 = vector.extract_strided_slice %3 {offsets = [8, 0], sizes = [8, 8], strides = [1, 1]} : vector<16x8xf32> to vector<8x8xf32>
    %cst_5 = arith.constant 0.000000e+00 : f32
    %8 = vector.broadcast %cst_5 : f32 to vector<8x1xf32>
    %9 = tpu.concatenate %8, %7 in 1 : vector<8x1xf32>, vector<8x8xf32> -> vector<8x9xf32>
    %10 = arith.addf %6, %9 : vector<8x9xf32>
    %c0_6 = arith.constant 0 : index
    %c0_7 = arith.constant 0 : index
    %11 = vector.load %arg4[%c0_6, %c0_7] : memref<8x9xf32, #tpu.memory_space<vmem>>, vector<8x9xf32>
    %12 = arith.mulf %10, %11 : vector<8x9xf32>
    %c0_8 = arith.constant 0 : index
    %c0_9 = arith.constant 0 : index
    %c0_10 = arith.constant 0 : index
    %13 = vector.load %arg5[%c0_8, %c0_9, %c0_10] : memref<1x8x9xf32, #tpu.memory_space<vmem>>, vector<1x8x9xf32>
    %14 = vector.shape_cast %13 : vector<1x8x9xf32> to vector<8x9xf32>
    %15 = vector.shape_cast %12 : vector<8x9xf32> to vector<1x8x9xf32>
    tpu.vector_store %arg5[%c0_8, %c0_9, %c0_10], %15 {strides = array<i32>} : memref<1x8x9xf32, #tpu.memory_space<vmem>>, vector<1x8x9xf32>,
    return
  }
  func.func @transform_0(%arg0: i32, %arg1: i32) -> (i32, i32, i32) {
    %c0_i32 = arith.constant 0 : i32
    %c0_i32_0 = arith.constant 0 : i32
    return %arg0, %c0_i32, %arg1 : i32, i32, i32
  }
  func.func @transform_1(%arg0: i32, %arg1: i32) -> (i32, i32) {
    %c0_i32 = arith.constant 0 : i32
    %c0_i32_0 = arith.constant 0 : i32
    %c0_i32_1 = arith.constant 0 : i32
    return %c0_i32, %c0_i32_0 : i32, i32
  }
  func.func @transform_2(%arg0: i32, %arg1: i32) -> (i32, i32) {
    %c0_i32 = arith.constant 0 : i32
    %c0_i32_0 = arith.constant 0 : i32
    %c0_i32_1 = arith.constant 0 : i32
    return %c0_i32, %c0_i32_0 : i32, i32
  }
  func.func @transform_3(%arg0: i32, %arg1: i32) -> (i32, i32, i32) {
    %c0_i32 = arith.constant 0 : i32
    %c0_i32_0 = arith.constant 0 : i32
    %c0_i32_1 = arith.constant 0 : i32
    return %arg0, %c0_i32, %c0_i32_0 : i32, i32, i32
  }
}

</mosaic_0001>

<llo_original>
// kernel: tpu_custom_call.1
$region0: #{tpu_custom_call.1}
  #allocation0 [shape = 'u32[]', space=smem, size = 0x4, offset = 0x4, fixed_abs, tag = 'smem constant byte address 0x4 - core index']
  #allocation1 [shape = 'u32[144,128]{1,0:T(1,128)}', space=vmem, size = 0x12000, scoped, tag = 'internal scratch']
  %s0 = inlined_call_operand.vmem [shape: f32[2,18,8], index: 0, kind: input, shape index: {}]
  %s1 = inlined_call_operand.vmem [shape: f32[16,18], index: 1, kind: input, shape index: {}]
  %s2 = inlined_call_operand.vmem [shape: f32[8,9], index: 2, kind: input, shape index: {}]
  %s3 = inlined_call_operand.hbm [shape: f32[2,8,9], index: 3, kind: output, shape index: {}]
  %s4 = sld [smem:[#allocation0]]
  $region45: #{tpu_custom_call.1} parent=0
    _
  %s6 = ssub.s32 1, %s4
  %s7 = scalar_select 0, %s6, %s4
  $region1: #{tpu_custom_call.1} parent=0
    #allocation2 [shape = 'u8[8192]{0}', space=vmem, size = 0x2000, scoped, tag = 'output window, operand 0']
    #allocation3 [shape = 's32[2]{0}', space=sflag, size = 0x8, scoped, tag = 'scoped memory for tpu_custom_call.1']
    %8 = vsyncpa [#allocation3], 0
    %s9 = scalar_lea.sflag [#allocation3], 1
    %10 = vsyncpa %s9, 0
    loop: start=0, step=1, limit=4
    $region2: #{tpu_custom_call.1} parent=1 // loop_pre_header
      _
    $region3: #{tpu_custom_call.1} parent=1 // loop_header
      %s12 = sphi 0, %s16
      %p13 = scmp.ge.s32.totalorder %s12, 4
      %s19 = sphi 0, %s31
      %s20 = sphi 0, %s27
      %s21 = sphi 0, %s19
      %s22 = sphi 0, %s20
      %s23 = sphi 0, %s21
      %s24 = sphi 0, %s22
      %s36 = sphi 0, %s38
      %s39 = sphi 0, %s36
      %s40 = sphi 0, %s39
      %s56 = sphi 0, %s40
      %s60 = sphi 0, %s60
      %s62 = sphi 0, %s60
      %s63 = sphi 0, %s62
      %s77 = sphi 0, %s63
      %s81 = sphi 0, %s81
      %s83 = sphi 0, %s81
      %s84 = sphi 0, %s83
      %s98 = sphi 0, %s84
      %s104 = sphi 0, %s106
      %s107 = sphi 0, %s104
      %s108 = sphi 0, %s107
      %s124 = sphi 0, %s108
    $region4: #{tpu_custom_call.1} parent=1 // loop_header_branch
      %15 = sbr.rel (%p13) target = $region8
    $region5: #{tpu_custom_call.1} parent=1 // loop_body
      %s17 = ssub.s32 %s12, 1
      %s18 = ssub.s32 %s12, 2
      %s25 = sadd.s32 1, %s20
      %p26 = scmp.ge.s32.totalorder %s25, 1
      %s27 = scalar_select %p26, 0, %s25
      %s28 = sadd.s32 1, %s19
      %s29 = scalar_select %p26, %s28, %s19
      %p30 = scmp.ge.s32.totalorder %s29, 2
      %s31 = scalar_select %p30, 0, %s29
      %s32 = ssub.s32 %s19, %s31
      %s33 = ssub.s32 %s20, %s27
      %s34 = sor.u32 %s32, %s33
      %p35 = scmp.eq.s32.totalorder %s34, 0
      %s37 = sadd.s32 %s36, 1
      %s38 = scalar_select %p35, %s36, %s37
      %p41 = pneg %p35
      %p42 = scmp.eq.s32.totalorder %s12, 1
      %p43 = por %p41, %p42
      %p44 = scmp.ne.s32.totalorder %s36, %s39
      %p45 = scmp.eq.s32.totalorder %s12, 0
      %p46 = por %p44, %p45
      %p47 = scmp.ne.s32.totalorder %s36, %s39
      %p48 = scmp.eq.s32.totalorder %s17, 1
      %p49 = por %p47, %p48
      %p50 = scmp.ne.s32.totalorder %s39, %s40
      %p51 = scmp.eq.s32.totalorder %s17, 0
      %p52 = por %p50, %p51
      %p53 = scmp.ne.s32.totalorder %s39, %s40
      %p54 = scmp.eq.s32.totalorder %s18, 1
      %p55 = por %p53, %p54
      %p57 = scmp.ne.s32.totalorder %s40, %s56
      %p58 = scmp.eq.s32.totalorder %s18, 0
      %p59 = por %p57, %p58
      %s61 = sadd.s32 %s60, 1
      %p64 = scmp.eq.s32.totalorder %s12, 1
      %p65 = scmp.ne.s32.totalorder %s60, %s62
      %p66 = scmp.eq.s32.totalorder %s12, 0
      %p67 = por %p65, %p66
      %p68 = scmp.ne.s32.totalorder %s60, %s62
      %p69 = scmp.eq.s32.totalorder %s17, 1
      %p70 = por %p68, %p69
      %p71 = scmp.ne.s32.totalorder %s62, %s63
      %p72 = scmp.eq.s32.totalorder %s17, 0
      %p73 = por %p71, %p72
      %p74 = scmp.ne.s32.totalorder %s62, %s63
      %p75 = scmp.eq.s32.totalorder %s18, 1
      %p76 = por %p74, %p75
      %p78 = scmp.ne.s32.totalorder %s63, %s77
      %p79 = scmp.eq.s32.totalorder %s18, 0
      %p80 = por %p78, %p79
      %s82 = sadd.s32 %s81, 1
      %p85 = scmp.eq.s32.totalorder %s12, 1
      %p86 = scmp.ne.s32.totalorder %s81, %s83
      %p87 = scmp.eq.s32.totalorder %s12, 0
      %p88 = por %p86, %p87
      %p89 = scmp.ne.s32.totalorder %s81, %s83
      %p90 = scmp.eq.s32.totalorder %s17, 1
      %p91 = por %p89, %p90
      %p92 = scmp.ne.s32.totalorder %s83, %s84
      %p93 = scmp.eq.s32.totalorder %s17, 0
      %p94 = por %p92, %p93
      %p95 = scmp.ne.s32.totalorder %s83, %s84
      %p96 = scmp.eq.s32.totalorder %s18, 1
      %p97 = por %p95, %p96
      %p99 = scmp.ne.s32.totalorder %s84, %s98
      %p100 = scmp.eq.s32.totalorder %s18, 0
      %p101 = por %p99, %p100
      %s102 = ssub.s32 %s19, %s31
      %p103 = scmp.eq.s32.totalorder %s102, 0
      %s105 = sadd.s32 %s104, 1
      %s106 = scalar_select %p103, %s104, %s105
      %p109 = pneg %p103
      %p110 = scmp.eq.s32.totalorder %s12, 1
      %p111 = por %p109, %p110
      %p112 = scmp.ne.s32.totalorder %s104, %s107
      %p113 = scmp.eq.s32.totalorder %s12, 0
      %p114 = por %p112, %p113
      %p115 = scmp.ne.s32.totalorder %s104, %s107
      %p116 = scmp.eq.s32.totalorder %s17, 1
      %p117 = por %p115, %p116
      %p118 = scmp.ne.s32.totalorder %s107, %s108
      %p119 = scmp.eq.s32.totalorder %s17, 0
      %p120 = por %p118, %p119
      %p121 = scmp.ne.s32.totalorder %s107, %s108
      %p122 = scmp.eq.s32.totalorder %s18, 1
      %p123 = por %p121, %p122
      %p125 = scmp.ne.s32.totalorder %s108, %s124
      %p126 = scmp.eq.s32.totalorder %s18, 0
      %p127 = por %p125, %p126
      %p128 = scmp.le.s32.totalorder 1, %s12
      %p129 = scmp.lt.s32.totalorder %s12, 3
      %p130 = pnand %p128, %p129
      %p131 = pneg %p130
      // Predicated region
      $region9: #{tpu_custom_call.1} parent=5 // pred_check
        _
      $region10: #{tpu_custom_call.1} parent=5 // pred_check_branch
        %133 = sbr.rel (%p130) target = $region12
      $region11: #{tpu_custom_call.1} parent=5 // pred_region
        %s134 = ssub.s32 %s12, 1
        // Predicated region
        $region13: #{tpu_custom_call.1} parent=11 // pred_check
          %p135 = pneg %p73
        $region14: #{tpu_custom_call.1} parent=11 // pred_check_branch
          %137 = sbr.rel (%p135) target = $region16
        $region15: #{tpu_custom_call.1} parent=11 // pred_region
          _
        $region16: #{tpu_custom_call.1} parent=11 // pred_fallthru
          _
        // Predicated region
        $region17: #{tpu_custom_call.1} parent=11 // pred_check
          %p138 = pneg %p94
        $region18: #{tpu_custom_call.1} parent=11 // pred_check_branch
          %140 = sbr.rel (%p138) target = $region20
        $region19: #{tpu_custom_call.1} parent=11 // pred_region
          _
        $region20: #{tpu_custom_call.1} parent=11 // pred_fallthru
          _
      $region12: #{tpu_custom_call.1} parent=5 // pred_fallthru
        _
      %p141 = scmp.lt.s32.totalorder %s12, 2
      // Predicated region
      $region21: #{tpu_custom_call.1} parent=5 // pred_check
        %p142 = pneg %p141
      $region22: #{tpu_custom_call.1} parent=5 // pred_check_branch
        %144 = sbr.rel (%p142) target = $region24
      $region23: #{tpu_custom_call.1} parent=5 // pred_region
        // Predicated region
        $region25: #{tpu_custom_call.1} parent=23 // pred_check
          %p145 = pneg %p46
        $region26: #{tpu_custom_call.1} parent=23 // pred_check_branch
          %147 = sbr.rel (%p145) target = $region28
        $region27: #{tpu_custom_call.1} parent=23 // pred_region
          %p148 = scmp.lt.s32.totalorder %s19, 1
          %s149 = scalar_select %p148, %s19, 1
          %p150 = scmp.lt.s32.totalorder %s20, 0
          %s151 = scalar_select %p150, %s20, 0
          %s152 = smul.addr %s149, 3
          %s153 = sadd.s32 %s151, %s152
          %s154 = smul.addr %s153, 8
          %s155 = scalar_lea.vmem %s0, %s154
        $region28: #{tpu_custom_call.1} parent=23 // pred_fallthru
          _
      $region24: #{tpu_custom_call.1} parent=5 // pred_fallthru
        _
      %p156 = scmp.le.s32.totalorder 1, %s12
      %p157 = scmp.lt.s32.totalorder %s12, 3
      %p158 = pnand %p156, %p157
      %p159 = pneg %p158
      // Predicated region
      $region29: #{tpu_custom_call.1} parent=5 // pred_check
        _
      $region30: #{tpu_custom_call.1} parent=5 // pred_check_branch
        %161 = sbr.rel (%p158) target = $region32
      $region31: #{tpu_custom_call.1} parent=5 // pred_region
        %s162 = ssub.s32 %s12, 1
        %p163 = scmp.lt.s32.totalorder %s21, 1
        %s164 = scalar_select %p163, %s21, 1
        %p165 = scmp.lt.s32.totalorder %s22, 0
        %s166 = scalar_select %p165, %s22, 0
        %s167 = smul.addr %s164, 3
        %s168 = sadd.s32 %s166, %s167
        %s169 = smul.addr %s168, 8
        %s170 = scalar_lea.vmem %s0, %s169
        %p171 = pneg %p52
        %p172 = pneg %p49
        %p173 = pneg %p73
        %p174 = pneg %p70
        %p175 = pneg %p94
        %p176 = pneg %p91
        %p177 = pneg %p120
        %p178 = pneg %p117
        %s179 = sand.u32 %s107, 1
        %s180 = scalar_lea.sflag [#allocation3], %s179
        %s181 = sand.u32 %s107, 1
        %s182 = smul.addr %s181, 8
        %s183 = scalar_lea.vmem [#allocation2], %s182
        %p184 = scmp.lt.s32.totalorder %s21, 1
        %s185 = scalar_select %p184, %s21, 1
        %p186 = scmp.lt.s32.totalorder %s22, 0
        %s187 = scalar_select %p186, %s22, 0
        %s188 = smul.addr %s185, 3
        %s189 = sadd.s32 %s187, %s188
        %s190 = smul.addr %s189, 8
        %s191 = scalar_lea.vmem %s0, %s190
        %v192 = vld [vmem:[%s1] sm:$0xff]
        %v193 = vld [vmem:[%s1 + $0x8] sm:$0xff]
        %v194 = vld [vmem:[%s191] sm:$0xff]
        %v195 = vld [vmem:[%s191 + $0x8] sm:$0xff]
        %v196 = vld [vmem:[%s191 + $0x10] sm:$0x3]
        %vm197 = vcmask 146432
        %v199 = vsel %vm197, %v192, 0
        %v202 = vsel %vm197, %v193, 0
        %vm204 = vcmask 1041408
        %v206 = vsel %vm204, %v196, 0
        %208 = vmatprep.subr.mxu0 0.0
        %209 = vmatpush1.msra.mxu0 0.0
        %210 = vmatprep.subr.mxu0 0.0
        %211 = vmatpush1.msra.mxu0 0.0
        %212 = vmatprep.subr.mxu0 0.0
        %213 = vmatpush1.msra.mxu0 0.0
        %214 = vmatprep.subr.mxu0 0.0
        %215 = vmatpush1.msra.mxu0 0.0
        %216 = vmatprep.subr.mxu0 0.0
        %217 = vmatpush1.msra.mxu0 0.0
        %218 = vmatprep.subr.mxu0 0.0
        %219 = vmatpush1.msra.mxu0 0.0
        %220 = vmatprep.subr.mxu0 0.0
        %221 = vmatpush1.msra.mxu0 0.0
        %222 = vmatprep.subr.mxu0 0.0
        %223 = vmatpush1.msra.mxu0 0.0
        %224 = vmatprep.subr.mxu0 0.0
        %225 = vmatpush1.msra.mxu0 0.0
        %226 = vmatprep.subr.mxu0 0.0
        %227 = vmatpush1.msra.mxu0 0.0
        %228 = vmatprep.subr.mxu0 0.0
        %229 = vmatpush1.msra.mxu0 0.0
        %230 = vmatprep.subr.mxu0 0.0
        %231 = vmatpush1.msra.mxu0 0.0
        %232 = vmatprep.subr.mxu0 0.0
        %233 = vmatpush1.msra.mxu0 0.0
        %234 = vmatprep.subr.mxu0 0.0
        %235 = vmatpush1.msra.mxu0 %v206
        %236 = vmatprep.subr.mxu0 0.0
        %237 = vmatpush1.msra.mxu0 %v195
        %238 = vmatprep.subr.mxu0 0.0
        %239 = vmatpush1.msra.mxu0 %v194
        %240 = vmatprep.subr.mxu0 0.0
        %241 = vmatpush2.msra.mxu0 0.0
        %242 = vmatprep.subr.mxu0 0.0
        %243 = vmatpush2.msra.mxu0 0.0
        %244 = vmatprep.subr.mxu0 0.0
        %245 = vmatpush2.msra.mxu0 0.0
        %246 = vmatprep.subr.mxu0 0.0
        %247 = vmatpush2.msra.mxu0 0.0
        %248 = vmatprep.subr.mxu0 0.0
        %249 = vmatpush2.msra.mxu0 0.0
        %250 = vmatprep.subr.mxu0 0.0
        %251 = vmatpush2.msra.mxu0 0.0
        %252 = vmatprep.subr.mxu0 0.0
        %253 = vmatpush2.msra.mxu0 0.0
        %254 = vmatprep.subr.mxu0 0.0
        %255 = vmatpush2.msra.mxu0 0.0
        %256 = vmatprep.subr.mxu0 0.0
        %257 = vmatpush2.msra.mxu0 0.0
        %258 = vmatprep.subr.mxu0 0.0
        %259 = vmatpush2.msra.mxu0 0.0
        %260 = vmatprep.subr.mxu0 0.0
        %261 = vmatpush2.msra.mxu0 0.0
        %262 = vmatprep.subr.mxu0 0.0
        %263 = vmatpush2.msra.mxu0 0.0
        %264 = vmatprep.subr.mxu0 0.0
        %265 = vmatpush2.msra.mxu0 0.0
        %266 = vmatprep.subr.mxu0 0.0
        %267 = vmatpush2.msra.mxu0 0.0
        %268 = vmatprep.subr.mxu0 0.0
        %269 = vmatpush2.msra.mxu0 0.0
        %270 = vmatprep.subr.mxu0 0.0
        %271 = vmatpush2.msra.mxu0 0.0
        %272 = vmatprep.mubr.f32.mxu0 0.0
        %273 = vmatmul.mubr.f32.gmra.mxu0 %v199
        %v274 = vpop.f32.mrf.mxu0
        %v275 = vadd.f32 0.0, %v274
        %v276 = vpop.f32.mrf.mxu0
        %277 = vmatprep.mubr.f32.mxu0 0.0
        %278 = vmatmul.mubr.f32.gmra.mxu0 %v202
        %v279 = vpop.f32.mrf.mxu0
        %v280 = vadd.f32 0.0, %v279
        %v281 = vpop.f32.mrf.mxu0
        %282 = vdwg.mxu0
        %vm283 = vcmask 64512
        %v284 = vsel %vm283, %v275, 0.0
        %286 = vrot.lane.b32.xlu0 %v280, 1
        %v287 = vpop.permute.xlu0 %286
        %vm289 = vcmask 7168
        %v290 = vsel %vm289, 0.0, %v287
        %v291 = vadd.f32 %v284, %v290
        %v292 = vld [vmem:[%s2] sm:$0xff]
        %v293 = vmul.f32 %v291, %v292
        %vm294 = vcmask 72704
        %295 = vst.msk [vmem:[%s183] sm:$0xff] %vm294, %v293
        %s296 = sand.u32 %s107, 1
        %s297 = scalar_lea.sflag [#allocation3], %s296
        %s298 = sand.u32 %s107, 1
        %s299 = smul.addr %s298, 8
        %s300 = scalar_lea.vmem [#allocation2], %s299
        // Predicated region
        $region33: #{tpu_custom_call.1} parent=31 // pred_check
          %p301 = pneg %p117
        $region34: #{tpu_custom_call.1} parent=31 // pred_check_branch
          %303 = sbr.rel (%p301) target = $region36
        $region35: #{tpu_custom_call.1} parent=31 // pred_region
          %s305 = ssub.s32 128, 128
          %306 = vsyncadd %s297, %s305
          %s307 = smul.addr %s21, 128
          %s308 = scalar_lea.hbm %s3, %s307
          %s310 = sshll.u32 %s300, 4
          %s311 = int_to_ptr.vmem [resolvable:$true] %s310
          %313 = dma.vmem_to_hbm [thread:$0]  %s311, 128, %s308, %s297
        $region36: #{tpu_custom_call.1} parent=31 // pred_fallthru
          _
      $region32: #{tpu_custom_call.1} parent=5 // pred_fallthru
        _
      %p314 = scmp.le.s32.totalorder 2, %s12
      // Predicated region
      $region37: #{tpu_custom_call.1} parent=5 // pred_check
        %p315 = pneg %p314
      $region38: #{tpu_custom_call.1} parent=5 // pred_check_branch
        %317 = sbr.rel (%p315) target = $region40
      $region39: #{tpu_custom_call.1} parent=5 // pred_region
        %s318 = ssub.s32 %s12, 2
        // Predicated region
        $region41: #{tpu_custom_call.1} parent=39 // pred_check
          %p319 = pneg %p123
        $region42: #{tpu_custom_call.1} parent=39 // pred_check_branch
          %321 = sbr.rel (%p319) target = $region44
        $region43: #{tpu_custom_call.1} parent=39 // pred_region
          %s322 = sand.u32 %s108, 1
          %s323 = scalar_lea.sflag [#allocation3], %s322
          %s324 = sand.u32 %s108, 1
          %s325 = smul.addr %s324, 8
          %s326 = scalar_lea.vmem [#allocation2], %s325
          %327 = dma.done %s323, 128
        $region44: #{tpu_custom_call.1} parent=39 // pred_fallthru
          _
      $region40: #{tpu_custom_call.1} parent=5 // pred_fallthru
        _
    $region6: #{tpu_custom_call.1} parent=1 // loop_footer
      %s16 = sadd.s32 1, %s12
    $region7: #{tpu_custom_call.1} parent=1 // loop_footer_branch
      %11 = sbr.rel target = $region3
    $region8: #{tpu_custom_call.1} parent=1 // loop_exit
      _
    %328 = vsyncpa [#allocation3], 1
    %s329 = scalar_lea.sflag [#allocation3], 1
    %330 = vsyncpa %s329, 1

</llo_original>
